<compile_context>
chip_gen: v7x
topology: tpu7x:2x2x1
jax: 0.10.0
libtpu: 0.0.40
codegen_flags: <defaults>
</compile_context>

<pallas_src>
import functools

import jax
import jax.numpy as jnp
from jax import lax
from jax.experimental import pallas as pl
from jax.experimental.pallas import tpu as pltpu

LRELU_SLOPE = 0.1

T_TILE_MAX = 512      # lane-dense tile of the output time/flat axis
COUT_TILE_MAX = 256   # output-channel tile (matches the 256-wide MXU on v6e/v7x)


# ---------------------------------------------------------------------------
# Pallas kernel: one (batch, cout-tile, time-tile) block of a grouped,
# strided 1-D convolution (the "time" axis may be a flattened (H, period)).
# ---------------------------------------------------------------------------
def _conv_kernel(w_ref, x_ref, b_ref, o_ref, *,
                 groups, stride, K, cin_g, lane_mult, t_tile, slope):
    # w_ref: (groups, 1, cout_tile, K*cin_g)      bf16, tap-major along lanes
    # x_ref: (groups*stride, 1, 1, cin_g, thalo)  bf16, phase-decomposed + halo
    # b_ref: (groups, 1, cout_tile, 1)            f32
    # o_ref: (groups, 1, 1, cout_tile, t_tile)    bf16
    def group_body(g, carry):
        acc = None
        for k in range(K):                       # static unroll over taps
            q, r = k // stride, k % stride       # polyphase: tap k -> (phase r, shift q)
            off = q * lane_mult
            xk = x_ref[g * stride + r, 0, 0, :, off:off + t_tile]   # (cin_g, t_tile)
            if cin_g == 1:
                # degenerate contraction-1 matmul -> VPU broadcast multiply
                wk = w_ref[g, 0, :, k:k + 1]                        # (cout_tile, 1)
                part = wk.astype(jnp.float32) * xk.astype(jnp.float32)
            else:
                wk = w_ref[g, 0, :, k * cin_g:(k + 1) * cin_g]      # (cout_tile, cin_g)
                part = jnp.dot(wk, xk, preferred_element_type=jnp.float32)
            acc = part if acc is None else acc + part
        acc = acc + b_ref[g, 0]                                     # bias (f32)
        if slope is not None:                                       # fused LeakyReLU
            acc = jnp.where(acc >= 0.0, acc, acc * slope)
        o_ref[g, 0, 0, :, :] = acc.astype(o_ref.dtype)
        return carry

    if groups == 1:
        group_body(0, 0)
    else:
        lax.fori_loop(0, groups, group_body, 0)


def _run_conv(xph, w, b, *, groups, stride, K, lane_mult, tout, slope):
    """xph: (groups*stride, B, Cin_g, L) phase-decomposed, zero-padded input.

    Output flat position j of group g needs xph[g*stride + (k%stride), b, :,
    j + (k//stride)*lane_mult] for each tap k -> handled in-kernel.
    """
    GS, B, Cin_g, L = xph.shape
    Cout = w.shape[0]
    Cout_g = Cout // groups
    assert GS == groups * stride and w.shape == (Cout, Cin_g, K)

    cout_tile = Cout_g if Cout_g <= COUT_TILE_MAX else COUT_TILE_MAX
    assert Cout_g % cout_tile == 0
    nct = Cout_g // cout_tile

    max_off = ((K - 1) // stride) * lane_mult
    if tout <= T_TILE_MAX:
        t_tile, nt = tout, 1
    else:
        t_tile = T_TILE_MAX                      # multiple of 128 -> unmasked stores
        nt = pl.cdiv(tout, t_tile)
    thalo = t_tile + max_off

    need = (nt - 1) * t_tile + thalo
    if need > L:
        xph = jnp.pad(xph, ((0, 0), (0, 0), (0, 0), (0, need - L)))
    xph = xph.astype(jnp.bfloat16)

    # Halo-duplicated lane tiles (only ~max_off/t_tile duplication, not Kx):
    # (groups*stride, B, nt, Cin_g, thalo)
    xin = jnp.stack(
        [xph[..., n * t_tile: n * t_tile + thalo] for n in range(nt)], axis=2)

    # weights: (Cout, Cin_g, K) -> tap-major lanes (groups, nct, cout_tile, K*Cin_g)
    w_r = (w.transpose(0, 2, 1)
            .reshape(groups, nct, cout_tile, K * Cin_g)
            .astype(jnp.bfloat16))
    b_r = b.reshape(groups, nct, cout_tile, 1).astype(jnp.float32)

    out = pl.pallas_call(
        functools.partial(_conv_kernel, groups=groups, stride=stride, K=K,
                          cin_g=Cin_g, lane_mult=lane_mult, t_tile=t_tile,
                          slope=slope),
        out_shape=jax.ShapeDtypeStruct(
            (groups, B, nct, cout_tile, nt * t_tile), jnp.bfloat16),
        grid=(B, nct, nt),   # time tile innermost -> weight block stays resident
        in_specs=[
            pl.BlockSpec((groups, 1, cout_tile, K * Cin_g),
                         lambda bb, cc, tt: (0, cc, 0, 0)),
            pl.BlockSpec((groups * stride, 1, 1, Cin_g, thalo),
                         lambda bb, cc, tt: (0, bb, tt, 0, 0)),
            pl.BlockSpec((groups, 1, cout_tile, 1),
                         lambda bb, cc, tt: (0, cc, 0, 0)),
        ],
        out_specs=pl.BlockSpec((groups, 1, 1, cout_tile, t_tile),
                               lambda bb, cc, tt: (0, bb, cc, 0, tt)),
        compiler_params=pltpu.CompilerParams(
            dimension_semantics=("parallel", "parallel", "parallel"),
            vmem_limit_bytes=48 * 1024 * 1024,   # v7x-safe (64 MiB physical VMEM)
        ),
    )(w_r, xin, b_r)

    out = out.transpose(1, 0, 2, 3, 4).reshape(B, Cout, nt * t_tile)[:, :, :tout]
    return out


def conv1d_pallas(x, w, b, *, stride=1, padding=0, groups=1, slope=None):
    """PyTorch Conv1d semantics (zero pad, grouped, bias) + optional LeakyReLU."""
    B, Cin, T = x.shape
    Cout, Cin_g, K = w.shape
    assert Cin == Cin_g * groups
    s = stride
    Tpad = T + 2 * padding
    Tout = (Tpad - K) // s + 1
    assert Tout >= 1
    xp = jnp.pad(x, ((0, 0), (0, 0), (padding, padding)))
    Lq = -(-Tpad // s)
    if Lq * s > Tpad:
        xp = jnp.pad(xp, ((0, 0), (0, 0), (0, Lq * s - Tpad)))
    # phase-decompose the strided time axis: (groups*s, B, Cin_g, Lq)
    xph = (xp.reshape(B, groups, Cin_g, Lq, s)
             .transpose(1, 4, 0, 2, 3)
             .reshape(groups * s, B, Cin_g, Lq))
    return _run_conv(xph, w, b, groups=groups, stride=s, K=K, lane_mult=1,
                     tout=Tout, slope=slope)


def conv2d_k1_pallas(x, w, b, *, stride, padding, slope):
    """PyTorch Conv2d with kernel (K,1), stride (s,1), padding (p,0) on NCHW.

    The period axis P is untouched by the conv, so (Hout, P) is flattened onto
    the lane axis (tap offsets become multiples of P) -> lane-dense output, no
    period-into-batch folding, no transposes of the feature maps.
    """
    B, Cin, H, P = x.shape
    Cout, Cin_w, K = w.shape
    assert Cin_w == Cin
    s = stride
    Hpad = H + 2 * padding
    Hout = (Hpad - K) // s + 1
    assert Hout >= 1
    xp = jnp.pad(x, ((0, 0), (0, 0), (padding, padding), (0, 0)))
    Hq = -(-Hpad // s)
    if Hq * s > Hpad:
        xp = jnp.pad(xp, ((0, 0), (0, 0), (0, Hq * s - Hpad), (0, 0)))
    # (s, B, Cin, Hq*P): phase r of H on the leading axis, (Hq,P) flat on lanes
    xph = (xp.reshape(B, Cin, Hq, s, P)
             .transpose(3, 0, 1, 2, 4)
             .reshape(s, B, Cin, Hq * P))
    out = _run_conv(xph, w, b, groups=1, stride=s, K=K, lane_mult=P,
                    tout=Hout * P, slope=slope)
    return out.reshape(B, Cout, Hout, P)


def avg_pool1d_4_2_2(x):
    """torch.nn.AvgPool1d(4, stride=2, padding=2), count_include_pad=True.

    Plain XLA pooling (memory-bound); no benefit from a pallas_call here.
    """
    s = lax.reduce_window(x, 0.0, lax.add,
                          window_dimensions=(1, 1, 4),
                          window_strides=(1, 1, 2),
                          padding=((0, 0), (0, 0), (2, 2)))
    return s * 0.25


# ---------------------------------------------------------------------------
# HiFiGAN discriminator architecture (standard jik876 / coqui config)
# ---------------------------------------------------------------------------
MPD_PERIODS = (2, 3, 5, 7, 11)
MPD_LAYERS = [  # (cin, cout, k, stride, pad) ; kernel is (k, 1) in 2-D
    (1, 32, 5, 3, 2),
    (32, 128, 5, 3, 2),
    (128, 512, 5, 3, 2),
    (512, 1024, 5, 3, 2),
    (1024, 1024, 5, 1, 2),
]
MPD_POST = (1024, 1, 3, 1, 1)

MSD_LAYERS = [  # (cin, cout, k, stride, pad, groups)
    (1, 128, 15, 1, 7, 1),
    (128, 128, 41, 2, 20, 4),
    (128, 256, 41, 2, 20, 16),
    (256, 512, 41, 4, 20, 16),
    (512, 1024, 41, 4, 20, 16),
    (1024, 1024, 41, 1, 20, 16),
    (1024, 1024, 5, 1, 2, 1),
]
MSD_POST = (1024, 1, 3, 1, 1, 1)
NUM_MSD_SCALES = 3


def _init_conv(key, cout, cin_g, k):
    wk, bk = jax.random.split(key)
    fan_in = cin_g * k
    w = jax.random.normal(wk, (cout, cin_g, k), jnp.float32) * (1.0 / jnp.sqrt(fan_in))
    b = 0.01 * jax.random.normal(bk, (cout,), jnp.float32)
    return w, b


def init_params(key):
    # TODO(synk): weight_norm reparameterization is an identity at init, so the
    # raw (w, b) tensors are used directly.
    params = {"mpd": [], "msd": []}
    for _ in MPD_PERIODS:
        convs = []
        for (cin, cout, k, s, p) in MPD_LAYERS:
            key, sub = jax.random.split(key)
            w, b = _init_conv(sub, cout, cin, k)
            convs.append({"w": w, "b": b, "stride": s, "pad": p})
        cin, cout, k, s, p = MPD_POST
        key, sub = jax.random.split(key)
        w, b = _init_conv(sub, cout, cin, k)
        params["mpd"].append(
            {"convs": convs, "post": {"w": w, "b": b, "stride": s, "pad": p}}
        )
    for _ in range(NUM_MSD_SCALES):
        convs = []
        for (cin, cout, k, s, p, g) in MSD_LAYERS:
            key, sub = jax.random.split(key)
            w, b = _init_conv(sub, cout, cin // g, k)
            convs.append({"w": w, "b": b, "stride": s, "pad": p, "groups": g})
        cin, cout, k, s, p, g = MSD_POST
        key, sub = jax.random.split(key)
        w, b = _init_conv(sub, cout, cin // g, k)
        params["msd"].append(
            {"convs": convs, "post": {"w": w, "b": b, "stride": s, "pad": p, "groups": g}}
        )
    return params


# ---------------------------------------------------------------------------
# Forward passes
# ---------------------------------------------------------------------------
def discriminator_p(x, dparams, period):
    """HiFiGAN DiscriminatorP. x: (B, 1, T) waveform."""
    B, C, T = x.shape
    if T % period != 0:
        n_pad = period - (T % period)
        assert n_pad < T, "reflect pad requires n_pad < T (same constraint as torch)"
        x = jnp.pad(x, ((0, 0), (0, 0), (0, n_pad)), mode="reflect")
        T = T + n_pad
    x = x.reshape(B, C, T // period, period)  # NCHW: (B, 1, T//p, p)
    feats = []
    for layer in dparams["convs"]:
        x = conv2d_k1_pallas(x, layer["w"], layer["b"],
                             stride=layer["stride"], padding=layer["pad"],
                             slope=LRELU_SLOPE)
        feats.append(x)
    post = dparams["post"]
    x = conv2d_k1_pallas(x, post["w"], post["b"],
                         stride=post["stride"], padding=post["pad"], slope=None)
    feats.append(x)
    score = x.reshape(B, -1)  # torch.flatten(x, 1, -1)
    return score, feats


def discriminator_s(x, dparams):
    """HiFiGAN DiscriminatorS. x: (B, 1, T)."""
    feats = []
    for layer in dparams["convs"]:
        x = conv1d_pallas(x, layer["w"], layer["b"],
                          stride=layer["stride"], padding=layer["pad"],
                          groups=layer["groups"], slope=LRELU_SLOPE)
        feats.append(x)
    post = dparams["post"]
    x = conv1d_pallas(x, post["w"], post["b"],
                      stride=post["stride"], padding=post["pad"],
                      groups=post["groups"], slope=None)
    feats.append(x)
    score = x.reshape(x.shape[0], -1)
    return score, feats


def hifigan_discriminator(x, params):
    """Returns (scores, feats): MPD scores/feats followed by MSD scores/feats."""
    scores, feats = [], []
    # MultiPeriodDiscriminator
    for period, dparams in zip(MPD_PERIODS, params["mpd"]):
        s, f = discriminator_p(x, dparams, period)
        scores.append(s)
        feats.append(f)
    # MultiScaleDiscriminator (progressive mean-pooling of the waveform)
    xm = x
    for i, dparams in enumerate(params["msd"]):
        if i != 0:
            xm = avg_pool1d_4_2_2(xm)
        s, f = discriminator_s(xm, dparams)
        scores.append(s)
        feats.append(f)
    return scores, feats


# ---------------------------------------------------------------------------
if __name__ == "__main__":
    key = jax.random.PRNGKey(0)
    pkey, xkey = jax.random.split(key)
    params = init_params(pkey)

    B, T = 2, 128                      # small waveform: (batch, 1, samples)
    x = jax.random.normal(xkey, (B, 1, T), jnp.float32)

    scores, feats = hifigan_discriminator(x, params)

    jax.tree_util.tree_map(lambda a: a.block_until_ready(), (scores, feats))

    assert len(scores) == len(MPD_PERIODS) + NUM_MSD_SCALES == 8
    assert len(feats) == 8
    assert all(len(f) == 6 for f in feats[: len(MPD_PERIODS)])   # 5 convs + post
    assert all(len(f) == 8 for f in feats[len(MPD_PERIODS):])    # 7 convs + post
    assert all(jnp.all(jnp.isfinite(s.astype(jnp.float32))) for s in scores)
    print("KERNEL_OK")
</pallas_src>

<mosaic_0001>
module attributes {stable_mosaic.version = 11 : i64} {
  func.func @_conv_kernel(%arg0: i32, %arg1: i32, %arg2: i32, %arg3: memref<1x1x32x5xbf16, #tpu.memory_space<vmem>>, %arg4: memref<3x1x1x1x46xbf16, #tpu.memory_space<vmem>>, %arg5: memref<1x1x32x1xf32, #tpu.memory_space<vmem>>, %arg6: memref<1x1x1x32x44xbf16, #tpu.memory_space<vmem>>) attributes {dimension_semantics = [#tpu.dimension_semantics<parallel>, #tpu.dimension_semantics<parallel>, #tpu.dimension_semantics<parallel>], iteration_bounds = array<i64: 2, 1, 1>, scalar_prefetch = 0 : i64, scratch_operands = 0 : i64, tpu.core_type = #tpu.core_type<tc>, window_params = [{transform_indices = @transform_0, window_bounds = array<i64: 1, 1, 32, 5>}, {transform_indices = @transform_1, window_bounds = array<i64: 3, 1, 1, 1, 46>}, {transform_indices = @transform_2, window_bounds = array<i64: 1, 1, 32, 1>}, {transform_indices = @transform_3, window_bounds = array<i64: 1, 1, 1, 32, 44>}]} {
    %c0 = arith.constant 0 : index
    %c0_0 = arith.constant 0 : index
    %c0_1 = arith.constant 0 : index
    %c0_2 = arith.constant 0 : index
    %c0_3 = arith.constant 0 : index
    %0 = vector.load %arg4[%c0, %c0_0, %c0_1, %c0_2, %c0_3] : memref<3x1x1x1x46xbf16, #tpu.memory_space<vmem>>, vector<1x1x1x1x44xbf16>
    %1 = vector.shape_cast %0 : vector<1x1x1x1x44xbf16> to vector<1x44xbf16>
    %c0_4 = arith.constant 0 : index
    %c0_5 = arith.constant 0 : index
    %c0_6 = arith.constant 0 : index
    %c0_7 = arith.constant 0 : index
    %2 = vector.load %arg3[%c0_4, %c0_5, %c0_6, %c0_7] : memref<1x1x32x5xbf16, #tpu.memory_space<vmem>>, vector<1x1x32x1xbf16>
    %3 = vector.shape_cast %2 : vector<1x1x32x1xbf16> to vector<32x1xbf16>
    %4 = arith.extf %3 : vector<32x1xbf16> to vector<32x1xf32>
    %5 = arith.extf %1 : vector<1x44xbf16> to vector<1x44xf32>
    %6 = vector.broadcast %4 : vector<32x1xf32> to vector<32x44xf32>
    %7 = vector.broadcast %5 : vector<1x44xf32> to vector<32x44xf32>
    %8 = arith.mulf %6, %7 : vector<32x44xf32>
    %c1 = arith.constant 1 : index
    %c0_8 = arith.constant 0 : index
    %c0_9 = arith.constant 0 : index
    %c0_10 = arith.constant 0 : index
    %c0_11 = arith.constant 0 : index
    %9 = vector.load %arg4[%c1, %c0_8, %c0_9, %c0_10, %c0_11] : memref<3x1x1x1x46xbf16, #tpu.memory_space<vmem>>, vector<1x1x1x1x44xbf16>
    %10 = vector.shape_cast %9 : vector<1x1x1x1x44xbf16> to vector<1x44xbf16>
    %c0_12 = arith.constant 0 : index
    %c0_13 = arith.constant 0 : index
    %c0_14 = arith.constant 0 : index
    %c1_15 = arith.constant 1 : index
    %11 = vector.load %arg3[%c0_12, %c0_13, %c0_14, %c1_15] : memref<1x1x32x5xbf16, #tpu.memory_space<vmem>>, vector<1x1x32x1xbf16>
    %12 = vector.shape_cast %11 : vector<1x1x32x1xbf16> to vector<32x1xbf16>
    %13 = arith.extf %12 : vector<32x1xbf16> to vector<32x1xf32>
    %14 = arith.extf %10 : vector<1x44xbf16> to vector<1x44xf32>
    %15 = vector.broadcast %13 : vector<32x1xf32> to vector<32x44xf32>
    %16 = vector.broadcast %14 : vector<1x44xf32> to vector<32x44xf32>
    %17 = arith.mulf %15, %16 : vector<32x44xf32>
    %18 = arith.addf %8, %17 : vector<32x44xf32>
    %c2 = arith.constant 2 : index
    %c0_16 = arith.constant 0 : index
    %c0_17 = arith.constant 0 : index
    %c0_18 = arith.constant 0 : index
    %c0_19 = arith.constant 0 : index
    %19 = vector.load %arg4[%c2, %c0_16, %c0_17, %c0_18, %c0_19] : memref<3x1x1x1x46xbf16, #tpu.memory_space<vmem>>, vector<1x1x1x1x44xbf16>
    %20 = vector.shape_cast %19 : vector<1x1x1x1x44xbf16> to vector<1x44xbf16>
    %c0_20 = arith.constant 0 : index
    %c0_21 = arith.constant 0 : index
    %c0_22 = arith.constant 0 : index
    %c2_23 = arith.constant 2 : index
    %21 = vector.load %arg3[%c0_20, %c0_21, %c0_22, %c2_23] : memref<1x1x32x5xbf16, #tpu.memory_space<vmem>>, vector<1x1x32x1xbf16>
    %22 = vector.shape_cast %21 : vector<1x1x32x1xbf16> to vector<32x1xbf16>
    %23 = arith.extf %22 : vector<32x1xbf16> to vector<32x1xf32>
    %24 = arith.extf %20 : vector<1x44xbf16> to vector<1x44xf32>
    %25 = vector.broadcast %23 : vector<32x1xf32> to vector<32x44xf32>
    %26 = vector.broadcast %24 : vector<1x44xf32> to vector<32x44xf32>
    %27 = arith.mulf %25, %26 : vector<32x44xf32>
    %28 = arith.addf %18, %27 : vector<32x44xf32>
    %c0_24 = arith.constant 0 : index
    %c0_25 = arith.constant 0 : index
    %c0_26 = arith.constant 0 : index
    %c0_27 = arith.constant 0 : index
    %c2_28 = arith.constant 2 : index
    %29 = vector.load %arg4[%c0_24, %c0_25, %c0_26, %c0_27, %c2_28] : memref<3x1x1x1x46xbf16, #tpu.memory_space<vmem>>, vector<1x1x1x1x44xbf16>
    %30 = vector.shape_cast %29 : vector<1x1x1x1x44xbf16> to vector<1x44xbf16>
    %c0_29 = arith.constant 0 : index
    %c0_30 = arith.constant 0 : index
    %c0_31 = arith.constant 0 : index
    %c3 = arith.constant 3 : index
    %31 = vector.load %arg3[%c0_29, %c0_30, %c0_31, %c3] : memref<1x1x32x5xbf16, #tpu.memory_space<vmem>>, vector<1x1x32x1xbf16>
    %32 = vector.shape_cast %31 : vector<1x1x32x1xbf16> to vector<32x1xbf16>
    %33 = arith.extf %32 : vector<32x1xbf16> to vector<32x1xf32>
    %34 = arith.extf %30 : vector<1x44xbf16> to vector<1x44xf32>
    %35 = vector.broadcast %33 : vector<32x1xf32> to vector<32x44xf32>
    %36 = vector.broadcast %34 : vector<1x44xf32> to vector<32x44xf32>
    %37 = arith.mulf %35, %36 : vector<32x44xf32>
    %38 = arith.addf %28, %37 : vector<32x44xf32>
    %c1_32 = arith.constant 1 : index
    %c0_33 = arith.constant 0 : index
    %c0_34 = arith.constant 0 : index
    %c0_35 = arith.constant 0 : index
    %c2_36 = arith.constant 2 : index
    %39 = vector.load %arg4[%c1_32, %c0_33, %c0_34, %c0_35, %c2_36] : memref<3x1x1x1x46xbf16, #tpu.memory_space<vmem>>, vector<1x1x1x1x44xbf16>
    %40 = vector.shape_cast %39 : vector<1x1x1x1x44xbf16> to vector<1x44xbf16>
    %c0_37 = arith.constant 0 : index
    %c0_38 = arith.constant 0 : index
    %c0_39 = arith.constant 0 : index
    %c4 = arith.constant 4 : index
    %41 = vector.load %arg3[%c0_37, %c0_38, %c0_39, %c4] : memref<1x1x32x5xbf16, #tpu.memory_space<vmem>>, vector<1x1x32x1xbf16>
    %42 = vector.shape_cast %41 : vector<1x1x32x1xbf16> to vector<32x1xbf16>
    %43 = arith.extf %42 : vector<32x1xbf16> to vector<32x1xf32>
    %44 = arith.extf %40 : vector<1x44xbf16> to vector<1x44xf32>
    %45 = vector.broadcast %43 : vector<32x1xf32> to vector<32x44xf32>
    %46 = vector.broadcast %44 : vector<1x44xf32> to vector<32x44xf32>
    %47 = arith.mulf %45, %46 : vector<32x44xf32>
    %48 = arith.addf %38, %47 : vector<32x44xf32>
    %c0_40 = arith.constant 0 : index
    %c0_41 = arith.constant 0 : index
    %c0_42 = arith.constant 0 : index
    %c0_43 = arith.constant 0 : index
    %49 = vector.load %arg5[%c0_40, %c0_41, %c0_42, %c0_43] : memref<1x1x32x1xf32, #tpu.memory_space<vmem>>, vector<1x1x32x1xf32>
    %50 = vector.shape_cast %49 : vector<1x1x32x1xf32> to vector<32x1xf32>
    %51 = vector.broadcast %50 : vector<32x1xf32> to vector<32x44xf32>
    %52 = arith.addf %48, %51 : vector<32x44xf32>
    %cst = arith.constant 0.000000e+00 : f32
    %53 = vector.broadcast %cst : f32 to vector<32x44xf32>
    %54 = arith.cmpf oge, %52, %53 : vector<32x44xf32>
    %cst_44 = arith.constant 1.000000e-01 : f32
    %55 = vector.broadcast %cst_44 : f32 to vector<32x44xf32>
    %56 = arith.mulf %52, %55 : vector<32x44xf32>
    %57 = arith.select %54, %52, %56 : vector<32x44xi1>, vector<32x44xf32>
    %58 = arith.truncf %57 : vector<32x44xf32> to vector<32x44xbf16>
    %c0_45 = arith.constant 0 : index
    %c0_46 = arith.constant 0 : index
    %c0_47 = arith.constant 0 : index
    %c0_48 = arith.constant 0 : index
    %c0_49 = arith.constant 0 : index
    %59 = vector.load %arg6[%c0_45, %c0_46, %c0_47, %c0_48, %c0_49] : memref<1x1x1x32x44xbf16, #tpu.memory_space<vmem>>, vector<1x1x1x32x44xbf16>
    %60 = vector.shape_cast %59 : vector<1x1x1x32x44xbf16> to vector<32x44xbf16>
    %61 = vector.shape_cast %58 : vector<32x44xbf16> to vector<1x1x1x32x44xbf16>
    tpu.vector_store %arg6[%c0_45, %c0_46, %c0_47, %c0_48, %c0_49], %61 {strides = array<i32>} : memref<1x1x1x32x44xbf16, #tpu.memory_space<vmem>>, vector<1x1x1x32x44xbf16>,
    return
  }
  func.func @transform_0(%arg0: i32, %arg1: i32, %arg2: i32) -> (i32, i32, i32, i32) {
    %c0_i32 = arith.constant 0 : i32
    %c0_i32_0 = arith.constant 0 : i32
    %c0_i32_1 = arith.constant 0 : i32
    %c0_i32_2 = arith.constant 0 : i32
    return %c0_i32, %arg1, %c0_i32_0, %c0_i32_1 : i32, i32, i32, i32
  }
  func.func @transform_1(%arg0: i32, %arg1: i32, %arg2: i32) -> (i32, i32, i32, i32, i32) {
    %c0_i32 = arith.constant 0 : i32
    %c0_i32_0 = arith.constant 0 : i32
    %c0_i32_1 = arith.constant 0 : i32
    %c0_i32_2 = arith.constant 0 : i32
    return %c0_i32, %arg0, %arg2, %c0_i32_0, %c0_i32_1 : i32, i32, i32, i32, i32
  }
  func.func @transform_2(%arg0: i32, %arg1: i32, %arg2: i32) -> (i32, i32, i32, i32) {
    %c0_i32 = arith.constant 0 : i32
    %c0_i32_0 = arith.constant 0 : i32
    %c0_i32_1 = arith.constant 0 : i32
    %c0_i32_2 = arith.constant 0 : i32
    return %c0_i32, %arg1, %c0_i32_0, %c0_i32_1 : i32, i32, i32, i32
  }
  func.func @transform_3(%arg0: i32, %arg1: i32, %arg2: i32) -> (i32, i32, i32, i32, i32) {
    %c0_i32 = arith.constant 0 : i32
    %c0_i32_0 = arith.constant 0 : i32
    %c0_i32_1 = arith.constant 0 : i32
    return %c0_i32, %arg0, %arg1, %c0_i32_0, %arg2 : i32, i32, i32, i32, i32
  }
}

</mosaic_0001>

<llo_original>
// kernel: tpu_custom_call.1
$region0: #{tpu_custom_call.1}
  #allocation0 [shape = 'u32[]', space=smem, size = 0x4, offset = 0x4, fixed_abs, tag = 'smem constant byte address 0x4 - core index']
  #allocation1 [shape = 'u32[144,128]{1,0:T(1,128)}', space=vmem, size = 0x12000, scoped, tag = 'internal scratch']
  %s0 = inlined_call_operand.vmem [shape: bf16[1,1,32,5], index: 0, kind: input, shape index: {}]
  %s1 = inlined_call_operand.vmem [shape: bf16[3,2,1,1,46], index: 1, kind: input, shape index: {}]
  %s2 = inlined_call_operand.vmem [shape: f32[1,1,32,1], index: 2, kind: input, shape index: {}]
  %s3 = inlined_call_operand.hbm [shape: bf16[1,2,1,32,44], index: 3, kind: output, shape index: {}]
  %s4 = sld [smem:[#allocation0]]
  $region79: #{tpu_custom_call.1} parent=0
    _
  %s6 = ssub.s32 1, %s4
  %s7 = scalar_select 0, %s6, %s4
  $region1: #{tpu_custom_call.1} parent=0
    #allocation2 [shape = 'u8[3072]{0}', space=vmem, size = 0xc00, scoped, tag = 'input window, operand 1']
    #allocation3 [shape = 'u8[16384]{0}', space=vmem, size = 0x4000, scoped, tag = 'output window, operand 0']
    #allocation4 [shape = 's32[2]{0}', space=sflag, size = 0x8, scoped, tag = 'scoped memory for tpu_custom_call.1']
    %8 = vsyncpa [#allocation4], 0
    %s9 = scalar_lea.sflag [#allocation4], 1
    %10 = vsyncpa %s9, 0
    loop: start=0, step=1, limit=4
    $region2: #{tpu_custom_call.1} parent=1 // loop_pre_header
      _
    $region3: #{tpu_custom_call.1} parent=1 // loop_header
      %s12 = sphi 0, %s16
      %p13 = scmp.ge.s32.totalorder %s12, 4
      %s19 = sphi 0, %s38
      %s20 = sphi 0, %s34
      %s21 = sphi 0, %s30
      %s22 = sphi 0, %s19
      %s23 = sphi 0, %s20
      %s24 = sphi 0, %s21
      %s25 = sphi 0, %s22
      %s26 = sphi 0, %s23
      %s27 = sphi 0, %s24
      %s41 = sphi 0, %s43
      %s44 = sphi 0, %s41
      %s45 = sphi 0, %s44
      %s61 = sphi 0, %s45
      %s69 = sphi 0, %s71
      %s72 = sphi 0, %s69
      %s73 = sphi 0, %s72
      %s89 = sphi 0, %s73
      %s95 = sphi 0, %s97
      %s98 = sphi 0, %s95
      %s99 = sphi 0, %s98
      %s115 = sphi 0, %s99
      %s125 = sphi 0, %s127
      %s128 = sphi 0, %s125
      %s129 = sphi 0, %s128
      %s145 = sphi 0, %s129
    $region4: #{tpu_custom_call.1} parent=1 // loop_header_branch
      %15 = sbr.rel (%p13) target = $region8
    $region5: #{tpu_custom_call.1} parent=1 // loop_body
      %s17 = ssub.s32 %s12, 1
      %s18 = ssub.s32 %s12, 2
      %s28 = sadd.s32 1, %s21
      %p29 = scmp.ge.s32.totalorder %s28, 1
      %s30 = scalar_select %p29, 0, %s28
      %s31 = sadd.s32 1, %s20
      %s32 = scalar_select %p29, %s31, %s20
      %p33 = scmp.ge.s32.totalorder %s32, 1
      %s34 = scalar_select %p33, 0, %s32
      %s35 = sadd.s32 1, %s19
      %s36 = scalar_select %p33, %s35, %s19
      %p37 = scmp.ge.s32.totalorder %s36, 2
      %s38 = scalar_select %p37, 0, %s36
      %s39 = ssub.s32 %s20, %s34
      %p40 = scmp.eq.s32.totalorder %s39, 0
      %s42 = sadd.s32 %s41, 1
      %s43 = scalar_select %p40, %s41, %s42
      %p46 = pneg %p40
      %p47 = scmp.eq.s32.totalorder %s12, 1
      %p48 = por %p46, %p47
      %p49 = scmp.ne.s32.totalorder %s41, %s44
      %p50 = scmp.eq.s32.totalorder %s12, 0
      %p51 = por %p49, %p50
      %p52 = scmp.ne.s32.totalorder %s41, %s44
      %p53 = scmp.eq.s32.totalorder %s17, 1
      %p54 = por %p52, %p53
      %p55 = scmp.ne.s32.totalorder %s44, %s45
      %p56 = scmp.eq.s32.totalorder %s17, 0
      %p57 = por %p55, %p56
      %p58 = scmp.ne.s32.totalorder %s44, %s45
      %p59 = scmp.eq.s32.totalorder %s18, 1
      %p60 = por %p58, %p59
      %p62 = scmp.ne.s32.totalorder %s45, %s61
      %p63 = scmp.eq.s32.totalorder %s18, 0
      %p64 = por %p62, %p63
      %s65 = ssub.s32 %s19, %s38
      %s66 = ssub.s32 %s21, %s30
      %s67 = sor.u32 %s65, %s66
      %p68 = scmp.eq.s32.totalorder %s67, 0
      %s70 = sadd.s32 %s69, 1
      %s71 = scalar_select %p68, %s69, %s70
      %p74 = pneg %p68
      %p75 = scmp.eq.s32.totalorder %s12, 1
      %p76 = por %p74, %p75
      %p77 = scmp.ne.s32.totalorder %s69, %s72
      %p78 = scmp.eq.s32.totalorder %s12, 0
      %p79 = por %p77, %p78
      %p80 = scmp.ne.s32.totalorder %s69, %s72
      %p81 = scmp.eq.s32.totalorder %s17, 1
      %p82 = por %p80, %p81
      %p83 = scmp.ne.s32.totalorder %s72, %s73
      %p84 = scmp.eq.s32.totalorder %s17, 0
      %p85 = por %p83, %p84
      %p86 = scmp.ne.s32.totalorder %s72, %s73
      %p87 = scmp.eq.s32.totalorder %s18, 1
      %p88 = por %p86, %p87
      %p90 = scmp.ne.s32.totalorder %s73, %s89
      %p91 = scmp.eq.s32.totalorder %s18, 0
      %p92 = por %p90, %p91
      %s93 = ssub.s32 %s20, %s34
      %p94 = scmp.eq.s32.totalorder %s93, 0
      %s96 = sadd.s32 %s95, 1
      %s97 = scalar_select %p94, %s95, %s96
      %p100 = pneg %p94
      %p101 = scmp.eq.s32.totalorder %s12, 1
      %p102 = por %p100, %p101
      %p103 = scmp.ne.s32.totalorder %s95, %s98
      %p104 = scmp.eq.s32.totalorder %s12, 0
      %p105 = por %p103, %p104
      %p106 = scmp.ne.s32.totalorder %s95, %s98
      %p107 = scmp.eq.s32.totalorder %s17, 1
      %p108 = por %p106, %p107
      %p109 = scmp.ne.s32.totalorder %s98, %s99
      %p110 = scmp.eq.s32.totalorder %s17, 0
      %p111 = por %p109, %p110
      %p112 = scmp.ne.s32.totalorder %s98, %s99
      %p113 = scmp.eq.s32.totalorder %s18, 1
      %p114 = por %p112, %p113
      %p116 = scmp.ne.s32.totalorder %s99, %s115
      %p117 = scmp.eq.s32.totalorder %s18, 0
      %p118 = por %p116, %p117
      %s119 = ssub.s32 %s19, %s38
      %s120 = ssub.s32 %s20, %s34
      %s121 = sor.u32 %s119, %s120
      %s122 = ssub.s32 %s21, %s30
      %s123 = sor.u32 %s121, %s122
      %p124 = scmp.eq.s32.totalorder %s123, 0
      %s126 = sadd.s32 %s125, 1
      %s127 = scalar_select %p124, %s125, %s126
      %p130 = pneg %p124
      %p131 = scmp.eq.s32.totalorder %s12, 1
      %p132 = por %p130, %p131
      %p133 = scmp.ne.s32.totalorder %s125, %s128
      %p134 = scmp.eq.s32.totalorder %s12, 0
      %p135 = por %p133, %p134
      %p136 = scmp.ne.s32.totalorder %s125, %s128
      %p137 = scmp.eq.s32.totalorder %s17, 1
      %p138 = por %p136, %p137
      %p139 = scmp.ne.s32.totalorder %s128, %s129
      %p140 = scmp.eq.s32.totalorder %s17, 0
      %p141 = por %p139, %p140
      %p142 = scmp.ne.s32.totalorder %s128, %s129
      %p143 = scmp.eq.s32.totalorder %s18, 1
      %p144 = por %p142, %p143
      %p146 = scmp.ne.s32.totalorder %s129, %s145
      %p147 = scmp.eq.s32.totalorder %s18, 0
      %p148 = por %p146, %p147
      %p149 = scmp.le.s32.totalorder 1, %s12
      %p150 = scmp.lt.s32.totalorder %s12, 3
      %p151 = pnand %p149, %p150
      %p152 = pneg %p151
      // Predicated region
      $region9: #{tpu_custom_call.1} parent=5 // pred_check
        _
      $region10: #{tpu_custom_call.1} parent=5 // pred_check_branch
        %154 = sbr.rel (%p151) target = $region12
      $region11: #{tpu_custom_call.1} parent=5 // pred_region
        %s155 = ssub.s32 %s12, 1
        // Predicated region
        $region13: #{tpu_custom_call.1} parent=11 // pred_check
          %p156 = pneg %p57
        $region14: #{tpu_custom_call.1} parent=11 // pred_check_branch
          %158 = sbr.rel (%p156) target = $region16
        $region15: #{tpu_custom_call.1} parent=11 // pred_region
          %p159 = scmp.lt.s32.totalorder %s23, 0
          %s160 = scalar_select %p159, %s23, 0
          %s161 = smul.addr %s160, 4
          %s162 = smul.addr %s161, 4
          %s163 = scalar_lea.vmem %s0, %s162
        $region16: #{tpu_custom_call.1} parent=11 // pred_fallthru
          _
        // Predicated region
        $region17: #{tpu_custom_call.1} parent=11 // pred_check
          %p164 = pneg %p111
        $region18: #{tpu_custom_call.1} parent=11 // pred_check_branch
          %166 = sbr.rel (%p164) target = $region20
        $region19: #{tpu_custom_call.1} parent=11 // pred_region
          %p167 = scmp.lt.s32.totalorder %s23, 0
          %s168 = scalar_select %p167, %s23, 0
          %s169 = smul.addr %s168, 4
          %s170 = smul.addr %s169, 8
          %s171 = scalar_lea.vmem %s2, %s170
        $region20: #{tpu_custom_call.1} parent=11 // pred_fallthru
          _
      $region12: #{tpu_custom_call.1} parent=5 // pred_fallthru
        _
      %p172 = scmp.lt.s32.totalorder %s12, 2
      // Predicated region
      $region21: #{tpu_custom_call.1} parent=5 // pred_check
        %p173 = pneg %p172
      $region22: #{tpu_custom_call.1} parent=5 // pred_check_branch
        %175 = sbr.rel (%p173) target = $region24
      $region23: #{tpu_custom_call.1} parent=5 // pred_region
        // Predicated region
        $region25: #{tpu_custom_call.1} parent=23 // pred_check
          %p176 = pneg %p79
        $region26: #{tpu_custom_call.1} parent=23 // pred_check_branch
          %178 = sbr.rel (%p176) target = $region28
        $region27: #{tpu_custom_call.1} parent=23 // pred_region
          %s179 = sand.u32 %s69, 1
          %s180 = sand.u32 %s69, 1
          %s181 = smul.addr %s180, 3
          %s182 = scalar_lea.vmem [#allocation2], %s181
          %s183 = sadd.s32 %s21, %s19
          %s184 = scalar_lea.vmem %s1, %s183
          // Predicated region
          $region29: #{tpu_custom_call.1} parent=27 // pred_check
            _
          $region30: #{tpu_custom_call.1} parent=27 // pred_check_branch
            %186 = sbr.rel (0) target = $region32
          $region31: #{tpu_custom_call.1} parent=27 // pred_region
            // Predicated region
            $region33: #{tpu_custom_call.1} parent=31 // pred_check
              _
            $region34: #{tpu_custom_call.1} parent=31 // pred_check_branch
              %188 = sbr.rel target = $region36
            $region35: #{tpu_custom_call.1} parent=31 // pred_region
              // Predicated region
              $region48: #{tpu_custom_call.1} parent=35 // pred_check
                _
              $region49: #{tpu_custom_call.1} parent=35 // pred_check_branch
                %207 = sbr.rel (0) target = $region51
              $region50: #{tpu_custom_call.1} parent=35 // pred_region
                loop: start=0, step=1, limit=1
                $region52: #{tpu_custom_call.1} parent=50 // loop_pre_header
                  _
                $region53: #{tpu_custom_call.1} parent=50 // loop_header
                  %s210 = sphi 0, %s214
                  %p211 = scmp.ge.s32.totalorder %s210, 1
                  %s215 = sphi %s184, %s184
                  %s216 = sphi %s182, %s182
                $region54: #{tpu_custom_call.1} parent=50 // loop_header_branch
                  %213 = sbr.rel (%p211) target = $region58
                $region55: #{tpu_custom_call.1} parent=50 // loop_body
                  %v217 = vld [vmem:[%s215] sm:$0x1]
                  %218 = vst [vmem:[%s216] sm:$0x1] %v217
                  %v219 = vld [vmem:[%s215 + $0x2] sm:$0x1]
                  %220 = vst [vmem:[%s216 + $0x1] sm:$0x1] %v219
                  %v221 = vld [vmem:[%s215 + $0x4] sm:$0x1]
                  %222 = vst [vmem:[%s216 + $0x2] sm:$0x1] %v221
                $region56: #{tpu_custom_call.1} parent=50 // loop_footer
                  %s214 = sadd.s32 1, %s210
                $region57: #{tpu_custom_call.1} parent=50 // loop_footer_branch
                  %209 = sbr.rel target = $region53
                $region58: #{tpu_custom_call.1} parent=50 // loop_exit
                  _
              $region51: #{tpu_custom_call.1} parent=35 // pred_fallthru
                _
            $region36: #{tpu_custom_call.1} parent=31 // pred_fallthru
              _
            // Predicated region
            $region37: #{tpu_custom_call.1} parent=31 // pred_check
              _
            $region38: #{tpu_custom_call.1} parent=31 // pred_check_branch
              %190 = sbr.rel (0) target = $region40
            $region39: #{tpu_custom_call.1} parent=31 // pred_region
              loop: start=0, step=1, limit=1
              $region41: #{tpu_custom_call.1} parent=39 // loop_pre_header
                _
              $region42: #{tpu_custom_call.1} parent=39 // loop_header
                %s193 = sphi 0, %s197
                %p194 = scmp.ge.s32.totalorder %s193, 1
                %s198 = sphi %s184, %s184
                %s199 = sphi %s182, %s182
              $region43: #{tpu_custom_call.1} parent=39 // loop_header_branch
                %196 = sbr.rel (%p194) target = $region47
              $region44: #{tpu_custom_call.1} parent=39 // loop_body
                %v200 = vld [vmem:[%s198] sm:$0x1]
                %201 = vst [vmem:[%s199] sm:$0x1] %v200
                %v202 = vld [vmem:[%s198 + $0x2] sm:$0x1]
                %203 = vst [vmem:[%s199 + $0x1] sm:$0x1] %v202
                %v204 = vld [vmem:[%s198 + $0x4] sm:$0x1]
                %205 = vst [vmem:[%s199 + $0x2] sm:$0x1] %v204
              $region45: #{tpu_custom_call.1} parent=39 // loop_footer
                %s197 = sadd.s32 1, %s193
              $region46: #{tpu_custom_call.1} parent=39 // loop_footer_branch
                %192 = sbr.rel target = $region42
              $region47: #{tpu_custom_call.1} parent=39 // loop_exit
                _
            $region40: #{tpu_custom_call.1} parent=31 // pred_fallthru
              _
          $region32: #{tpu_custom_call.1} parent=27 // pred_fallthru
            _
          %223 = vnop
        $region28: #{tpu_custom_call.1} parent=23 // pred_fallthru
          _
      $region24: #{tpu_custom_call.1} parent=5 // pred_fallthru
        _
      %p224 = scmp.le.s32.totalorder 1, %s12
      %p225 = scmp.lt.s32.totalorder %s12, 3
      %p226 = pnand %p224, %p225
      %p227 = pneg %p226
      // Predicated region
      $region59: #{tpu_custom_call.1} parent=5 // pred_check
        _
      $region60: #{tpu_custom_call.1} parent=5 // pred_check_branch
        %229 = sbr.rel (%p226) target = $region62
      $region61: #{tpu_custom_call.1} parent=5 // pred_region
        %s230 = ssub.s32 %s12, 1
        %s231 = sand.u32 %s72, 1
        %s232 = sand.u32 %s72, 1
        %s233 = smul.addr %s232, 3
        %s234 = scalar_lea.vmem [#allocation2], %s233
        // Predicated region
        $region63: #{tpu_custom_call.1} parent=61 // pred_check
          %p235 = pneg %p85
        $region64: #{tpu_custom_call.1} parent=61 // pred_check_branch
          %237 = sbr.rel (%p235) target = $region66
        $region65: #{tpu_custom_call.1} parent=61 // pred_region
          _
        $region66: #{tpu_custom_call.1} parent=61 // pred_fallthru
          _
        %p238 = scmp.lt.s32.totalorder %s23, 0
        %s239 = scalar_select %p238, %s23, 0
        %s240 = smul.addr %s239, 4
        %s241 = smul.addr %s240, 4
        %s242 = scalar_lea.vmem %s0, %s241
        %p243 = pneg %p57
        %p244 = pneg %p54
        %s245 = sand.u32 %s72, 1
        %s246 = sand.u32 %s72, 1
        %s247 = smul.addr %s246, 3
        %s248 = scalar_lea.vmem [#allocation2], %s247
        %p249 = pneg %p85
        %p250 = pneg %p82
        %p251 = scmp.lt.s32.totalorder %s23, 0
        %s252 = scalar_select %p251, %s23, 0
        %s253 = smul.addr %s252, 4
        %s254 = smul.addr %s253, 8
        %s255 = scalar_lea.vmem %s2, %s254
        %p256 = pneg %p111
        %p257 = pneg %p108
        %p258 = pneg %p141
        %p259 = pneg %p138
        %s260 = sand.u32 %s128, 1
        %s261 = scalar_lea.sflag [#allocation4], %s260
        %s262 = sand.u32 %s128, 1
        %s263 = smul.addr %s262, 16
        %s264 = scalar_lea.vmem [#allocation3], %s263
        %p265 = scmp.lt.s32.totalorder %s23, 0
        %s266 = scalar_select %p265, %s23, 0
        %s267 = smul.addr %s266, 4
        %s268 = smul.addr %s267, 4
        %s269 = scalar_lea.vmem %s0, %s268
        %p270 = scmp.lt.s32.totalorder %s23, 0
        %s271 = scalar_select %p270, %s23, 0
        %s272 = smul.addr %s271, 4
        %s273 = smul.addr %s272, 8
        %s274 = scalar_lea.vmem %s2, %s273
        %v275 = vld [vmem:[%s234] sm:$0x1]
        %v276 = vld [vmem:[%s269] sm:$0xf]
        %v277 = vld [vmem:[%s269 + $0x4] sm:$0xf]
        %v278 = vld [vmem:[%s269 + $0x8] sm:$0xf]
        %v279 = vld [vmem:[%s269 + $0xc] sm:$0xf]
        %v280 = vunpack.c.l.bf16 %v276
        %v281 = vunpack.c.l.bf16 %v277
        %v282 = vunpack.c.l.bf16 %v278
        %v283 = vunpack.c.l.bf16 %v279
        %v284 = vunpack.c.l.bf16 %v275
        %286 = vset.pattern.permute.xlu0 0
        %287 = vperm.xlu0 %286, %v280
        %v288 = vpop.permute.xlu0 %287
        %291 = vset.pattern.permute.xlu0 0
        %292 = vperm.xlu0 %291, %v281
        %v293 = vpop.permute.xlu0 %292
        %296 = vset.pattern.permute.xlu0 0
        %297 = vperm.xlu0 %296, %v282
        %v298 = vpop.permute.xlu0 %297
        %301 = vset.pattern.permute.xlu0 0
        %302 = vperm.xlu0 %301, %v283
        %v303 = vpop.permute.xlu0 %302
        %v305 = vlaneseq
        %v306 = vshrl.u32 %v305, 7
        %v307 = vsub.s32 0, %v306
        %v308 = vrot.slane %v284, %v307
        %v309 = vmul.f32 %v288, %v308
        %v310 = vmul.f32 %v293, %v308
        %v311 = vmul.f32 %v298, %v308
        %v312 = vmul.f32 %v303, %v308
        %s313 = scalar_lea.vmem %s234, 1 [#allocation2]
        %v314 = vld [vmem:[%s313] sm:$0x1]
        %v315 = vunpack.c.l.bf16 %v314
        %316 = vset.pattern.permute.xlu0 1
        %317 = vperm.xlu0 %316, %v280
        %v318 = vpop.permute.xlu0 %317
        %320 = vset.pattern.permute.xlu0 1
        %321 = vperm.xlu0 %320, %v281
        %v322 = vpop.permute.xlu0 %321
        %324 = vset.pattern.permute.xlu0 1
        %325 = vperm.xlu0 %324, %v282
        %v326 = vpop.permute.xlu0 %325
        %328 = vset.pattern.permute.xlu0 1
        %329 = vperm.xlu0 %328, %v283
        %v330 = vpop.permute.xlu0 %329
        %v332 = vlaneseq
        %v333 = vshrl.u32 %v332, 7
        %v334 = vsub.s32 0, %v333
        %v335 = vrot.slane %v315, %v334
        %v336 = vmul.f32 %v318, %v335
        %v337 = vmul.f32 %v322, %v335
        %v338 = vmul.f32 %v326, %v335
        %v339 = vmul.f32 %v330, %v335
        %v340 = vadd.f32 %v309, %v336
        %v341 = vadd.f32 %v310, %v337
        %v342 = vadd.f32 %v311, %v338
        %v343 = vadd.f32 %v312, %v339
        %s344 = scalar_lea.vmem %s234, 2 [#allocation2]
        %v345 = vld [vmem:[%s344] sm:$0x1]
        %v346 = vunpack.c.l.bf16 %v345
        %347 = vset.pattern.permute.xlu0 2
        %348 = vperm.xlu0 %347, %v280
        %v349 = vpop.permute.xlu0 %348
        %351 = vset.pattern.permute.xlu0 2
        %352 = vperm.xlu0 %351, %v281
        %v353 = vpop.permute.xlu0 %352
        %355 = vset.pattern.permute.xlu0 2
        %356 = vperm.xlu0 %355, %v282
        %v357 = vpop.permute.xlu0 %356
        %359 = vset.pattern.permute.xlu0 2
        %360 = vperm.xlu0 %359, %v283
        %v361 = vpop.permute.xlu0 %360
        %v363 = vlaneseq
        %v364 = vshrl.u32 %v363, 7
        %v365 = vsub.s32 0, %v364
        %v366 = vrot.slane %v346, %v365
        %v367 = vmul.f32 %v349, %v366
        %v368 = vmul.f32 %v353, %v366
        %v369 = vmul.f32 %v357, %v366
        %v370 = vmul.f32 %v361, %v366
        %v371 = vadd.f32 %v340, %v367
        %v372 = vadd.f32 %v341, %v368
        %v373 = vadd.f32 %v342, %v369
        %v374 = vadd.f32 %v343, %v370
        %375 = vset.pattern.permute.xlu0 3
        %376 = vperm.xlu0 %375, %v280
        %v377 = vpop.permute.xlu0 %376
        %379 = vset.pattern.permute.xlu0 3
        %380 = vperm.xlu0 %379, %v281
        %v381 = vpop.permute.xlu0 %380
        %383 = vset.pattern.permute.xlu0 3
        %384 = vperm.xlu0 %383, %v282
        %v385 = vpop.permute.xlu0 %384
        %387 = vset.pattern.permute.xlu0 3
        %388 = vperm.xlu0 %387, %v283
        %v389 = vpop.permute.xlu0 %388
        %v391 = vmul.f32 %v377, %v308
        %v392 = vmul.f32 %v381, %v308
        %v393 = vmul.f32 %v385, %v308
        %v394 = vmul.f32 %v389, %v308
        %399 = vrot.lane.b32.xlu0 %v391, 126
        %v400 = vpop.permute.xlu0 %399
        %401 = vrot.lane.b32.xlu0 %v392, 126
        %v402 = vpop.permute.xlu0 %401
        %403 = vrot.lane.b32.xlu0 %v393, 126
        %v404 = vpop.permute.xlu0 %403
        %405 = vrot.lane.b32.xlu0 %v394, 126
        %v406 = vpop.permute.xlu0 %405
        %v411 = vadd.f32 %v371, %v400
        %v412 = vadd.f32 %v372, %v402
        %v413 = vadd.f32 %v373, %v404
        %v414 = vadd.f32 %v374, %v406
        %415 = vset.pattern.permute.xlu0 4
        %416 = vperm.xlu0 %415, %v280
        %v417 = vpop.permute.xlu0 %416
        %419 = vset.pattern.permute.xlu0 4
        %420 = vperm.xlu0 %419, %v281
        %v421 = vpop.permute.xlu0 %420
        %423 = vset.pattern.permute.xlu0 4
        %424 = vperm.xlu0 %423, %v282
        %v425 = vpop.permute.xlu0 %424
        %427 = vset.pattern.permute.xlu0 4
        %428 = vperm.xlu0 %427, %v283
        %v429 = vpop.permute.xlu0 %428
        %v431 = vmul.f32 %v417, %v335
        %v432 = vmul.f32 %v421, %v335
        %v433 = vmul.f32 %v425, %v335
        %v434 = vmul.f32 %v429, %v335
        %439 = vrot.lane.b32.xlu0 %v431, 126
        %v440 = vpop.permute.xlu0 %439
        %441 = vrot.lane.b32.xlu0 %v432, 126
        %v442 = vpop.permute.xlu0 %441
        %443 = vrot.lane.b32.xlu0 %v433, 126
        %v444 = vpop.permute.xlu0 %443
        %445 = vrot.lane.b32.xlu0 %v434, 126
        %v446 = vpop.permute.xlu0 %445
        %v451 = vadd.f32 %v411, %v440
        %v452 = vadd.f32 %v412, %v442
        %v453 = vadd.f32 %v413, %v444
        %v454 = vadd.f32 %v414, %v446
        %v455 = vld [vmem:[%s274] sm:$0xff]
        %v456 = vld [vmem:[%s274 + $0x8] sm:$0xff]
        %v457 = vld [vmem:[%s274 + $0x10] sm:$0xff]
        %v458 = vld [vmem:[%s274 + $0x18] sm:$0xff]
        %460 = vset.pattern.permute.xlu0 0
        %461 = vperm.xlu0 %460, %v455
        %v462 = vpop.permute.xlu0 %461
        %465 = vset.pattern.permute.xlu0 0
        %466 = vperm.xlu0 %465, %v456
        %v467 = vpop.permute.xlu0 %466
        %470 = vset.pattern.permute.xlu0 0
        %471 = vperm.xlu0 %470, %v457
        %v472 = vpop.permute.xlu0 %471
        %475 = vset.pattern.permute.xlu0 0
        %476 = vperm.xlu0 %475, %v458
        %v477 = vpop.permute.xlu0 %476
        %v479 = vadd.f32 %v451, %v462
        %v480 = vadd.f32 %v452, %v467
        %v481 = vadd.f32 %v453, %v472
        %v482 = vadd.f32 %v454, %v477
        %vm483 = vcmp.ge.f32.partialorder %v479, 0.0
        %vm484 = vcmp.ge.f32.partialorder %v480, 0.0
        %vm485 = vcmp.ge.f32.partialorder %v481, 0.0
        %vm486 = vcmp.ge.f32.partialorder %v482, 0.0
        %v487 = vmul.f32 %v479, 0.1
        %v488 = vmul.f32 %v480, 0.1
        %v489 = vmul.f32 %v481, 0.1
        %v490 = vmul.f32 %v482, 0.1
        %v491 = vsel %vm483, %v479, %v487
        %v492 = vsel %vm484, %v480, %v488
        %v493 = vsel %vm485, %v481, %v489
        %v494 = vsel %vm486, %v482, %v490
        %v495 = vpack.c.bf16 %v492, %v491
        %v496 = vpack.c.bf16 %v494, %v493
        %v499 = vunpack.c.l.b16 %v495
        %v500 = vunpack.c.h.b16 %v495
        %v501 = vunpack.c.l.b16 %v496
        %v502 = vunpack.c.h.b16 %v496
        %v503 = vpack.c.b16 %v499, %v499
        %v504 = vpack.c.b16 %v500, %v500
        %v505 = vpack.c.b16 %v501, %v501
        %v506 = vpack.c.b16 %v502, %v502
        %vm511 = vcmask 355328
        %512 = vst.msk [vmem:[%s264] sm:$0xf] %vm511, %v503
        %513 = vst.msk [vmem:[%s264 + $0x4] sm:$0xf] %vm511, %v504
        %514 = vst.msk [vmem:[%s264 + $0x8] sm:$0xf] %vm511, %v505
        %515 = vst.msk [vmem:[%s264 + $0xc] sm:$0xf] %vm511, %v506
        %s516 = sand.u32 %s128, 1
        %s517 = scalar_lea.sflag [#allocation4], %s516
        %s518 = sand.u32 %s128, 1
        %s519 = smul.addr %s518, 16
        %s520 = scalar_lea.vmem [#allocation3], %s519
        // Predicated region
        $region67: #{tpu_custom_call.1} parent=61 // pred_check
          %p521 = pneg %p138
        $region68: #{tpu_custom_call.1} parent=61 // pred_check_branch
          %523 = sbr.rel (%p521) target = $region70
        $region69: #{tpu_custom_call.1} parent=61 // pred_region
          %s525 = ssub.s32 256, 256
          %526 = vsyncadd %s517, %s525
          %s527 = smul.addr %s23, 4
          %s528 = sadd.s32 %s24, %s527
          %s529 = smul.addr %s22, 4
          %s530 = sadd.s32 %s528, %s529
          %s531 = smul.addr %s530, 64
          %s532 = scalar_lea.hbm %s3, %s531
          %s533 = sshll.u32 %s520, 4
          %s534 = int_to_ptr.vmem [resolvable:$true] %s533
          %539 = dma.vmem_to_hbm [thread:$0]  %s534, 256, %s532, %s517, 64, 64, 4
        $region70: #{tpu_custom_call.1} parent=61 // pred_fallthru
          _
      $region62: #{tpu_custom_call.1} parent=5 // pred_fallthru
        _
      %p540 = scmp.le.s32.totalorder 2, %s12
      // Predicated region
      $region71: #{tpu_custom_call.1} parent=5 // pred_check
        %p541 = pneg %p540
      $region72: #{tpu_custom_call.1} parent=5 // pred_check_branch
        %543 = sbr.rel (%p541) target = $region74
      $region73: #{tpu_custom_call.1} parent=5 // pred_region
        %s544 = ssub.s32 %s12, 2
        // Predicated region
        $region75: #{tpu_custom_call.1} parent=73 // pred_check
          %p545 = pneg %p144
        $region76: #{tpu_custom_call.1} parent=73 // pred_check_branch
          %547 = sbr.rel (%p545) target = $region78
        $region77: #{tpu_custom_call.1} parent=73 // pred_region
          %s548 = sand.u32 %s129, 1
          %s549 = scalar_lea.sflag [#allocation4], %s548
          %s550 = sand.u32 %s129, 1
          %s551 = smul.addr %s550, 16
          %s552 = scalar_lea.vmem [#allocation3], %s551
          %553 = dma.done %s549, 256
        $region78: #{tpu_custom_call.1} parent=73 // pred_fallthru
          _
      $region74: #{tpu_custom_call.1} parent=5 // pred_fallthru
        _
    $region6: #{tpu_custom_call.1} parent=1 // loop_footer
      %s16 = sadd.s32 1, %s12
    $region7: #{tpu_custom_call.1} parent=1 // loop_footer_branch
      %11 = sbr.rel target = $region3
    $region8: #{tpu_custom_call.1} parent=1 // loop_exit
      _
    %554 = vsyncpa [#allocation4], 1
    %s555 = scalar_lea.sflag [#allocation4], 1
    %556 = vsyncpa %s555, 1

</llo_original>
